<compile_context>
chip_gen: v6e
topology: v6e:2x2x1
jax: 0.10.0
libtpu: 0.0.40
codegen_flags: <defaults>
</compile_context>

<pallas_src>
import jax
import jax.numpy as jnp
from jax.experimental import pallas as pl
from jax.experimental.pallas import tpu as pltpu


def _patch_embed_matmul_kernel(w_ref, a_ref, o_ref):
    # w_ref: (OC, K)      -- resident projection weight
    # a_ref: (1, K, TP)   -- patch matrix tile (K = C*k*k, TP positions)
    # o_ref: (1, OC, TP)  -- output tile, already in (channel, position) order
    o_ref[0, :, :] = jnp.dot(
        w_ref[...], a_ref[0, :, :], preferred_element_type=jnp.float32
    ).astype(o_ref.dtype)


def patch_embedding_forward(x_nchw, weight, patch_size, patch_stride):
    """PatchEmbedding forward. x_nchw: (B, C, H, W); weight: (embed_dim, C, k, k)."""
    # TODO(synk): general (overlapping) stride != kernel_size Conv2d path is not
    # implemented; FasterNet's PatchEmbedding always uses stride == kernel_size.
    assert patch_size == patch_stride, "requires kernel_size == stride"
    B, C, H, W = x_nchw.shape
    OC = weight.shape[0]
    k = patch_size
    H2, W2 = H // k, W // k
    K = C * k * k
    P = H2 * W2
    itemsize = jnp.dtype(x_nchw.dtype).itemsize

    # ---- glue: rearrange activation to (B, K, P), K order = (c, kh, kw) ----
    # (B, C, H2, k, W2, k) -> (B, C, k, k, H2, W2) -> (B, K, P)
    a = x_nchw.reshape(B, C, H2, k, W2, k)
    a = jnp.transpose(a, (0, 1, 3, 5, 2, 4))
    a = a.reshape(B, K, P)

    # ---- lane-dense tiling of the position axis ----
    LANE = 128
    TP_MAX = 1024  # keep per-step blocks small enough for v7x (64 MiB VMEM)
    P_pad = ((P + LANE - 1) // LANE) * LANE
    n_blk = P_pad // LANE
    best = 1
    for d in range(1, n_blk + 1):
        if n_blk % d == 0 and d * LANE <= TP_MAX:
            best = d
    TP = best * LANE
    if P_pad != P:
        a = jnp.pad(a, ((0, 0), (0, 0), (0, P_pad - P)))

    # weight (OC, C, k, k) -> (OC, K), matching the (c, kh, kw) flatten order
    w_mat = weight.reshape(OC, K)

    grid = (B, P_pad // TP)

    # Per-step VMEM footprint (double-buffered activation/output + weight).
    block_bytes = (OC * K + 2 * K * TP + 2 * OC * TP) * itemsize
    vmem_limit = int(min(32 * 1024 * 1024, max(8 * 1024 * 1024, 4 * block_bytes)))

    cost = pl.CostEstimate(
        flops=2 * B * OC * K * P_pad,
        transcendentals=0,
        bytes_accessed=(a.size + w_mat.size + B * OC * P_pad) * itemsize,
    )

    out = pl.pallas_call(
        _patch_embed_matmul_kernel,
        out_shape=jax.ShapeDtypeStruct((B, OC, P_pad), x_nchw.dtype),
        grid=grid,
        in_specs=[
            pl.BlockSpec((OC, K), lambda b, p: (0, 0)),       # resident weight
            pl.BlockSpec((1, K, TP), lambda b, p: (b, 0, p)),  # patch tile
        ],
        out_specs=pl.BlockSpec((1, OC, TP), lambda b, p: (b, 0, p)),
        compiler_params=pltpu.CompilerParams(
            dimension_semantics=("parallel", "parallel"),
            vmem_limit_bytes=vmem_limit,
        ),
        cost_estimate=cost,
    )(w_mat, a)

    # ---- glue: drop padding, reshape (free) back to NCHW ----
    out = out[:, :, :P].reshape(B, OC, H2, W2)
    # norm_layer=None -> nn.Identity(), so nothing more to do.
    return out


if __name__ == "__main__":
    # Small shapes consistent with the module: B=2, in_chans=4, 16x16 image,
    # patch_size=stride=4, embed_dim=32.
    B, C, H, W = 2, 4, 16, 16
    patch_size = 4
    patch_stride = 4
    embed_dim = 32

    key = jax.random.PRNGKey(0)
    kx, kw = jax.random.split(key)
    x = jax.random.normal(kx, (B, C, H, W), dtype=jnp.float32)
    weight = (
        jax.random.normal(kw, (embed_dim, C, patch_size, patch_size), dtype=jnp.float32)
        * 0.1
    )

    out = patch_embedding_forward(x, weight, patch_size, patch_stride)
    out = jax.block_until_ready(out)

    # Silent correctness check against XLA's conv (same semantics as PyTorch Conv2d).
    ref = jax.lax.conv_general_dilated(
        x,
        weight,
        window_strides=(patch_stride, patch_stride),
        padding="VALID",
        dimension_numbers=("NCHW", "OIHW", "NCHW"),
    )
    assert out.shape == (B, embed_dim, H // patch_size, W // patch_size), out.shape
    assert jnp.allclose(out, ref, atol=1e-5, rtol=1e-5)

    print("KERNEL_OK")
</pallas_src>

<mosaic_0001>
module attributes {stable_mosaic.version = 11 : i64} {
  func.func @_patch_embed_matmul_kernel(%arg0: i32, %arg1: i32, %arg2: memref<32x64xf32, #tpu.memory_space<vmem>>, %arg3: memref<1x64x128xf32, #tpu.memory_space<vmem>>, %arg4: memref<1x32x128xf32, #tpu.memory_space<vmem>>) attributes {dimension_semantics = [#tpu.dimension_semantics<parallel>, #tpu.dimension_semantics<parallel>], iteration_bounds = array<i64: 2, 1>, scalar_prefetch = 0 : i64, scratch_operands = 0 : i64, tpu.core_type = #tpu.core_type<tc>, window_params = [{pipeline_mode = #tpu.pipeline_mode<synchronous>, transform_indices = @transform_0, window_bounds = array<i64: 32, 64>}, {transform_indices = @transform_1, window_bounds = array<i64: 1, 64, 128>}, {transform_indices = @transform_2, window_bounds = array<i64: 1, 32, 128>}]} {
    %c0 = arith.constant 0 : index
    %c0_0 = arith.constant 0 : index
    %0 = vector.load %arg2[%c0, %c0_0] : memref<32x64xf32, #tpu.memory_space<vmem>>, vector<32x64xf32>
    %c0_1 = arith.constant 0 : index
    %c0_2 = arith.constant 0 : index
    %c0_3 = arith.constant 0 : index
    %1 = vector.load %arg3[%c0_1, %c0_2, %c0_3] : memref<1x64x128xf32, #tpu.memory_space<vmem>>, vector<1x64x128xf32>
    %2 = vector.shape_cast %1 : vector<1x64x128xf32> to vector<64x128xf32>
    %cst = arith.constant dense<0.000000e+00> : vector<32x128xf32>
    %3 = tpu.matmul %0, %2, %cst {dimension_numbers = #tpu.dot_dimension_numbers<[1], [0], [0], [1], [0, 0, 1, 1], [], []>} : vector<32x64xf32>, vector<64x128xf32>, vector<32x128xf32> -> vector<32x128xf32>
    %c0_4 = arith.constant 0 : index
    %c0_5 = arith.constant 0 : index
    %c0_6 = arith.constant 0 : index
    %4 = vector.load %arg4[%c0_4, %c0_5, %c0_6] : memref<1x32x128xf32, #tpu.memory_space<vmem>>, vector<1x32x128xf32>
    %5 = vector.shape_cast %4 : vector<1x32x128xf32> to vector<32x128xf32>
    %6 = vector.shape_cast %3 : vector<32x128xf32> to vector<1x32x128xf32>
    tpu.vector_store %arg4[%c0_4, %c0_5, %c0_6], %6 {strides = array<i32>} : memref<1x32x128xf32, #tpu.memory_space<vmem>>, vector<1x32x128xf32>,
    return
  }
  func.func @transform_0(%arg0: i32, %arg1: i32) -> (i32, i32) {
    %c0_i32 = arith.constant 0 : i32
    %c0_i32_0 = arith.constant 0 : i32
    %c0_i32_1 = arith.constant 0 : i32
    return %c0_i32, %c0_i32_0 : i32, i32
  }
  func.func @transform_1(%arg0: i32, %arg1: i32) -> (i32, i32, i32) {
    %c0_i32 = arith.constant 0 : i32
    %c0_i32_0 = arith.constant 0 : i32
    return %arg0, %c0_i32, %arg1 : i32, i32, i32
  }
  func.func @transform_2(%arg0: i32, %arg1: i32) -> (i32, i32, i32) {
    %c0_i32 = arith.constant 0 : i32
    %c0_i32_0 = arith.constant 0 : i32
    return %arg0, %c0_i32, %arg1 : i32, i32, i32
  }
}

</mosaic_0001>

<llo_original>
// kernel: tpu_custom_call.1
$region0: #{tpu_custom_call.1}
  #allocation0 [shape = 'u32[]', space=smem, size = 0x4, offset = 0x4, fixed_abs, tag = 'smem constant byte address 0x4 - core index']
  #allocation1 [shape = 'u32[144,128]{1,0:T(1,128)}', space=vmem, size = 0x12000, scoped, tag = 'internal scratch']
  %s0 = inlined_call_operand.hbm [shape: f32[32,64], index: 0, kind: input, shape index: {}]
  %s1 = inlined_call_operand.hbm [shape: f32[2,64,128], index: 1, kind: input, shape index: {}]
  %s2 = inlined_call_operand.hbm [shape: f32[2,32,128], index: 2, kind: output, shape index: {}]
  %s3 = sld [smem:[#allocation0]]
  $region49: #{tpu_custom_call.1} parent=0
    _
  %s5 = ssub.s32 1, %s3
  %s6 = scalar_select 0, %s5, %s3
  $region1: #{tpu_custom_call.1} parent=0
    #allocation2 [shape = 'u8[16384]{0}', space=vmem, size = 0x4000, scoped, tag = 'input window, operand 0, single buffered']
    #allocation3 [shape = 's32[2]{0}', space=sflag, size = 0x8, scoped, tag = 'scoped memory for tpu_custom_call.1']
    #allocation4 [shape = 's32[2]{0}', space=sflag, size = 0x8, scoped, tag = 'scoped memory for tpu_custom_call.1']
    #allocation5 [shape = 'u8[65536]{0}', space=vmem, size = 0x10000, scoped, tag = 'input window, operand 1']
    #allocation6 [shape = 's32[2]{0}', space=sflag, size = 0x8, scoped, tag = 'scoped memory for tpu_custom_call.1']
    #allocation7 [shape = 'u8[32768]{0}', space=vmem, size = 0x8000, scoped, tag = 'output window, operand 0']
    %7 = vsyncpa [#allocation3], 0
    %8 = vsyncpa [#allocation6], 0
    %s9 = scalar_lea.sflag [#allocation6], 1
    %10 = vsyncpa %s9, 0
    %11 = vsyncpa [#allocation4], 0
    %s12 = scalar_lea.sflag [#allocation4], 1
    %13 = vsyncpa %s12, 0
    loop: start=0, step=1, limit=4
    $region2: #{tpu_custom_call.1} parent=1 // loop_pre_header
      _
    $region3: #{tpu_custom_call.1} parent=1 // loop_header
      %s15 = sphi 0, %s19
      %p16 = scmp.ge.s32.totalorder %s15, 4
      %s22 = sphi 0, %s34
      %s23 = sphi 0, %s30
      %s24 = sphi 0, %s22
      %s25 = sphi 0, %s23
      %s26 = sphi 0, %s24
      %s27 = sphi 0, %s25
      %s35 = sphi 0, %s35
      %s37 = sphi 0, %s35
      %s38 = sphi 0, %s37
      %s52 = sphi 0, %s38
      %s60 = sphi 0, %s62
      %s63 = sphi 0, %s60
      %s64 = sphi 0, %s63
      %s80 = sphi 0, %s64
      %s88 = sphi 0, %s90
      %s91 = sphi 0, %s88
      %s92 = sphi 0, %s91
      %s108 = sphi 0, %s92
    $region4: #{tpu_custom_call.1} parent=1 // loop_header_branch
      %18 = sbr.rel (%p16) target = $region8
    $region5: #{tpu_custom_call.1} parent=1 // loop_body
      %s20 = ssub.s32 %s15, 1
      %s21 = ssub.s32 %s15, 2
      %s28 = sadd.s32 1, %s23
      %p29 = scmp.ge.s32.totalorder %s28, 1
      %s30 = scalar_select %p29, 0, %s28
      %s31 = sadd.s32 1, %s22
      %s32 = scalar_select %p29, %s31, %s22
      %p33 = scmp.ge.s32.totalorder %s32, 2
      %s34 = scalar_select %p33, 0, %s32
      %s36 = sadd.s32 %s35, 1
      %p39 = scmp.eq.s32.totalorder %s15, 1
      %p40 = scmp.ne.s32.totalorder %s35, %s37
      %p41 = scmp.eq.s32.totalorder %s15, 0
      %p42 = por %p40, %p41
      %p43 = scmp.ne.s32.totalorder %s35, %s37
      %p44 = scmp.eq.s32.totalorder %s20, 1
      %p45 = por %p43, %p44
      %p46 = scmp.ne.s32.totalorder %s37, %s38
      %p47 = scmp.eq.s32.totalorder %s20, 0
      %p48 = por %p46, %p47
      %p49 = scmp.ne.s32.totalorder %s37, %s38
      %p50 = scmp.eq.s32.totalorder %s21, 1
      %p51 = por %p49, %p50
      %p53 = scmp.ne.s32.totalorder %s38, %s52
      %p54 = scmp.eq.s32.totalorder %s21, 0
      %p55 = por %p53, %p54
      %s56 = ssub.s32 %s22, %s34
      %s57 = ssub.s32 %s23, %s30
      %s58 = sor.u32 %s56, %s57
      %p59 = scmp.eq.s32.totalorder %s58, 0
      %s61 = sadd.s32 %s60, 1
      %s62 = scalar_select %p59, %s60, %s61
      %p65 = pneg %p59
      %p66 = scmp.eq.s32.totalorder %s15, 1
      %p67 = por %p65, %p66
      %p68 = scmp.ne.s32.totalorder %s60, %s63
      %p69 = scmp.eq.s32.totalorder %s15, 0
      %p70 = por %p68, %p69
      %p71 = scmp.ne.s32.totalorder %s60, %s63
      %p72 = scmp.eq.s32.totalorder %s20, 1
      %p73 = por %p71, %p72
      %p74 = scmp.ne.s32.totalorder %s63, %s64
      %p75 = scmp.eq.s32.totalorder %s20, 0
      %p76 = por %p74, %p75
      %p77 = scmp.ne.s32.totalorder %s63, %s64
      %p78 = scmp.eq.s32.totalorder %s21, 1
      %p79 = por %p77, %p78
      %p81 = scmp.ne.s32.totalorder %s64, %s80
      %p82 = scmp.eq.s32.totalorder %s21, 0
      %p83 = por %p81, %p82
      %s84 = ssub.s32 %s22, %s34
      %s85 = ssub.s32 %s23, %s30
      %s86 = sor.u32 %s84, %s85
      %p87 = scmp.eq.s32.totalorder %s86, 0
      %s89 = sadd.s32 %s88, 1
      %s90 = scalar_select %p87, %s88, %s89
      %p93 = pneg %p87
      %p94 = scmp.eq.s32.totalorder %s15, 1
      %p95 = por %p93, %p94
      %p96 = scmp.ne.s32.totalorder %s88, %s91
      %p97 = scmp.eq.s32.totalorder %s15, 0
      %p98 = por %p96, %p97
      %p99 = scmp.ne.s32.totalorder %s88, %s91
      %p100 = scmp.eq.s32.totalorder %s20, 1
      %p101 = por %p99, %p100
      %p102 = scmp.ne.s32.totalorder %s91, %s92
      %p103 = scmp.eq.s32.totalorder %s20, 0
      %p104 = por %p102, %p103
      %p105 = scmp.ne.s32.totalorder %s91, %s92
      %p106 = scmp.eq.s32.totalorder %s21, 1
      %p107 = por %p105, %p106
      %p109 = scmp.ne.s32.totalorder %s92, %s108
      %p110 = scmp.eq.s32.totalorder %s21, 0
      %p111 = por %p109, %p110
      %p112 = scmp.le.s32.totalorder 1, %s15
      %p113 = scmp.lt.s32.totalorder %s15, 3
      %p114 = pnand %p112, %p113
      %p115 = pneg %p114
      // Predicated region
      $region9: #{tpu_custom_call.1} parent=5 // pred_check
        _
      $region10: #{tpu_custom_call.1} parent=5 // pred_check_branch
        %117 = sbr.rel (%p114) target = $region12
      $region11: #{tpu_custom_call.1} parent=5 // pred_region
        %s118 = ssub.s32 %s15, 1
        // Predicated region
        $region13: #{tpu_custom_call.1} parent=11 // pred_check
          %p119 = pneg %p48
        $region14: #{tpu_custom_call.1} parent=11 // pred_check_branch
          %121 = sbr.rel (%p119) target = $region16
        $region15: #{tpu_custom_call.1} parent=11 // pred_region
          %s123 = ssub.s32 512, 512
          %124 = vsyncadd [#allocation3], %s123
          %s125 = sshll.u32 [#allocation2], 4
          %s126 = int_to_ptr.vmem [resolvable:$true] %s125
          %131 = dma.hbm_to_vmem [thread:$0]  %s0, 512, %s126, [#allocation3], 128, 128, 8
        $region16: #{tpu_custom_call.1} parent=11 // pred_fallthru
          _
      $region12: #{tpu_custom_call.1} parent=5 // pred_fallthru
        _
      %p132 = scmp.lt.s32.totalorder %s15, 2
      // Predicated region
      $region17: #{tpu_custom_call.1} parent=5 // pred_check
        %p133 = pneg %p132
      $region18: #{tpu_custom_call.1} parent=5 // pred_check_branch
        %135 = sbr.rel (%p133) target = $region20
      $region19: #{tpu_custom_call.1} parent=5 // pred_region
        // Predicated region
        $region21: #{tpu_custom_call.1} parent=19 // pred_check
          %p136 = pneg %p70
        $region22: #{tpu_custom_call.1} parent=19 // pred_check_branch
          %138 = sbr.rel (%p136) target = $region24
        $region23: #{tpu_custom_call.1} parent=19 // pred_region
          %s139 = sand.u32 %s60, 1
          %s140 = scalar_lea.sflag [#allocation6], %s139
          %s141 = sand.u32 %s60, 1
          %s142 = smul.addr %s141, 64
          %s143 = scalar_lea.vmem [#allocation5], %s142
          %s145 = ssub.s32 1024, 1024
          %146 = vsyncadd %s140, %s145
          %s147 = smul.addr %s22, 8
          %s148 = sadd.s32 %s23, %s147
          %s149 = smul.addr %s148, 128
          %s150 = scalar_lea.hbm %s1, %s149
          %s151 = sshll.u32 %s143, 4
          %s152 = int_to_ptr.vmem [resolvable:$true] %s151
          %157 = dma.hbm_to_vmem [thread:$0]  %s150, 1024, %s152, %s140, 128, 128, 8
        $region24: #{tpu_custom_call.1} parent=19 // pred_fallthru
          _
      $region20: #{tpu_custom_call.1} parent=5 // pred_fallthru
        _
      %p158 = scmp.le.s32.totalorder 1, %s15
      %p159 = scmp.lt.s32.totalorder %s15, 3
      %p160 = pnand %p158, %p159
      %p161 = pneg %p160
      // Predicated region
      $region25: #{tpu_custom_call.1} parent=5 // pred_check
        _
      $region26: #{tpu_custom_call.1} parent=5 // pred_check_branch
        %163 = sbr.rel (%p160) target = $region28
      $region27: #{tpu_custom_call.1} parent=5 // pred_region
        %s164 = ssub.s32 %s15, 1
        // Predicated region
        $region29: #{tpu_custom_call.1} parent=27 // pred_check
          %p165 = pneg %p48
        $region30: #{tpu_custom_call.1} parent=27 // pred_check_branch
          %167 = sbr.rel (%p165) target = $region32
        $region31: #{tpu_custom_call.1} parent=27 // pred_region
          %168 = dma.done [#allocation3], 512
        $region32: #{tpu_custom_call.1} parent=27 // pred_fallthru
          _
        %s169 = sand.u32 %s63, 1
        %s170 = scalar_lea.sflag [#allocation6], %s169
        %s171 = sand.u32 %s63, 1
        %s172 = smul.addr %s171, 64
        %s173 = scalar_lea.vmem [#allocation5], %s172
        // Predicated region
        $region33: #{tpu_custom_call.1} parent=27 // pred_check
          %p174 = pneg %p76
        $region34: #{tpu_custom_call.1} parent=27 // pred_check_branch
          %176 = sbr.rel (%p174) target = $region36
        $region35: #{tpu_custom_call.1} parent=27 // pred_region
          %177 = dma.done %s170, 1024
        $region36: #{tpu_custom_call.1} parent=27 // pred_fallthru
          _
        %p178 = pneg %p48
        %p179 = pneg %p45
        %s180 = sand.u32 %s63, 1
        %s181 = scalar_lea.sflag [#allocation6], %s180
        %s182 = sand.u32 %s63, 1
        %s183 = smul.addr %s182, 64
        %s184 = scalar_lea.vmem [#allocation5], %s183
        %p185 = pneg %p76
        %p186 = pneg %p73
        %p187 = pneg %p104
        %p188 = pneg %p101
        %s189 = sand.u32 %s91, 1
        %s190 = scalar_lea.sflag [#allocation4], %s189
        %s191 = sand.u32 %s91, 1
        %s192 = smul.addr %s191, 32
        %s193 = scalar_lea.vmem [#allocation7], %s192
        %v194 = vld [vmem:[#allocation2] sm:$0xff]
        %v195 = vld [vmem:[#allocation2 + $0x8] sm:$0xff]
        %v196 = vld [vmem:[#allocation2 + $0x10] sm:$0xff]
        %v197 = vld [vmem:[#allocation2 + $0x18] sm:$0xff]
        %v198 = vld [vmem:[%s173] sm:$0xff]
        %v199 = vld [vmem:[%s173 + $0x8] sm:$0xff]
        %v200 = vld [vmem:[%s173 + $0x10] sm:$0xff]
        %v201 = vld [vmem:[%s173 + $0x18] sm:$0xff]
        %v202 = vld [vmem:[%s173 + $0x20] sm:$0xff]
        %v203 = vld [vmem:[%s173 + $0x28] sm:$0xff]
        %v204 = vld [vmem:[%s173 + $0x30] sm:$0xff]
        %v205 = vld [vmem:[%s173 + $0x38] sm:$0xff]
        %vm206 = vcmask 523264
        %v208 = vsel %vm206, %v194, 0
        %v211 = vsel %vm206, %v195, 0
        %v214 = vsel %vm206, %v196, 0
        %v217 = vsel %vm206, %v197, 0
        %219 = vmatprep.subr.mxu0 0.0
        %220 = vmatpush1.msra.mxu0 0.0
        %221 = vmatprep.subr.mxu0 0.0
        %222 = vmatpush1.msra.mxu0 0.0
        %223 = vmatprep.subr.mxu0 0.0
        %224 = vmatpush1.msra.mxu0 0.0
        %225 = vmatprep.subr.mxu0 0.0
        %226 = vmatpush1.msra.mxu0 0.0
        %227 = vmatprep.subr.mxu0 0.0
        %228 = vmatpush1.msra.mxu0 0.0
        %229 = vmatprep.subr.mxu0 0.0
        %230 = vmatpush1.msra.mxu0 0.0
        %231 = vmatprep.subr.mxu0 0.0
        %232 = vmatpush1.msra.mxu0 0.0
        %233 = vmatprep.subr.mxu0 0.0
        %234 = vmatpush1.msra.mxu0 0.0
        %235 = vmatprep.subr.mxu0 0.0
        %236 = vmatpush1.msra.mxu0 %v205
        %237 = vmatprep.subr.mxu0 0.0
        %238 = vmatpush1.msra.mxu0 %v204
        %239 = vmatprep.subr.mxu0 0.0
        %240 = vmatpush1.msra.mxu0 %v203
        %241 = vmatprep.subr.mxu0 0.0
        %242 = vmatpush1.msra.mxu0 %v202
        %243 = vmatprep.subr.mxu0 0.0
        %244 = vmatpush1.msra.mxu0 %v201
        %245 = vmatprep.subr.mxu0 0.0
        %246 = vmatpush1.msra.mxu0 %v200
        %247 = vmatprep.subr.mxu0 0.0
        %248 = vmatpush1.msra.mxu0 %v199
        %249 = vmatprep.subr.mxu0 0.0
        %250 = vmatpush1.msra.mxu0 %v198
        %251 = vmatprep.subr.mxu0 0.0
        %252 = vmatpush2.msra.mxu0 0.0
        %253 = vmatprep.subr.mxu0 0.0
        %254 = vmatpush2.msra.mxu0 0.0
        %255 = vmatprep.subr.mxu0 0.0
        %256 = vmatpush2.msra.mxu0 0.0
        %257 = vmatprep.subr.mxu0 0.0
        %258 = vmatpush2.msra.mxu0 0.0
        %259 = vmatprep.subr.mxu0 0.0
        %260 = vmatpush2.msra.mxu0 0.0
        %261 = vmatprep.subr.mxu0 0.0
        %262 = vmatpush2.msra.mxu0 0.0
        %263 = vmatprep.subr.mxu0 0.0
        %264 = vmatpush2.msra.mxu0 0.0
        %265 = vmatprep.subr.mxu0 0.0
        %266 = vmatpush2.msra.mxu0 0.0
        %267 = vmatprep.subr.mxu0 0.0
        %268 = vmatpush2.msra.mxu0 0.0
        %269 = vmatprep.subr.mxu0 0.0
        %270 = vmatpush2.msra.mxu0 0.0
        %271 = vmatprep.subr.mxu0 0.0
        %272 = vmatpush2.msra.mxu0 0.0
        %273 = vmatprep.subr.mxu0 0.0
        %274 = vmatpush2.msra.mxu0 0.0
        %275 = vmatprep.subr.mxu0 0.0
        %276 = vmatpush2.msra.mxu0 0.0
        %277 = vmatprep.subr.mxu0 0.0
        %278 = vmatpush2.msra.mxu0 0.0
        %279 = vmatprep.subr.mxu0 0.0
        %280 = vmatpush2.msra.mxu0 0.0
        %281 = vmatprep.subr.mxu0 0.0
        %282 = vmatpush2.msra.mxu0 0.0
        %283 = vmatprep.mubr.f32.mxu0 0.0
        %284 = vmatmul.mubr.f32.gmra.mxu0 %v208
        %v285 = vpop.f32.mrf.mxu0
        %v286 = vadd.f32 0.0, %v285
        %v287 = vpop.f32.mrf.mxu0
        %288 = vmatprep.mubr.f32.mxu0 0.0
        %289 = vmatmul.mubr.f32.gmra.mxu0 %v211
        %v290 = vpop.f32.mrf.mxu0
        %v291 = vadd.f32 0.0, %v290
        %v292 = vpop.f32.mrf.mxu0
        %293 = vmatprep.mubr.f32.mxu0 0.0
        %294 = vmatmul.mubr.f32.gmra.mxu0 %v214
        %v295 = vpop.f32.mrf.mxu0
        %v296 = vadd.f32 0.0, %v295
        %v297 = vpop.f32.mrf.mxu0
        %298 = vmatprep.mubr.f32.mxu0 0.0
        %299 = vmatmul.mubr.f32.gmra.mxu0 %v217
        %v300 = vpop.f32.mrf.mxu0
        %v301 = vadd.f32 0.0, %v300
        %v302 = vpop.f32.mrf.mxu0
        %303 = vdwg.mxu0
        %304 = vst [vmem:[%s193] sm:$0xff] %v286
        %305 = vst [vmem:[%s193 + $0x8] sm:$0xff] %v291
        %306 = vst [vmem:[%s193 + $0x10] sm:$0xff] %v296
        %307 = vst [vmem:[%s193 + $0x18] sm:$0xff] %v301
        %s308 = sand.u32 %s91, 1
        %s309 = scalar_lea.sflag [#allocation4], %s308
        %s310 = sand.u32 %s91, 1
        %s311 = smul.addr %s310, 32
        %s312 = scalar_lea.vmem [#allocation7], %s311
        // Predicated region
        $region37: #{tpu_custom_call.1} parent=27 // pred_check
          %p313 = pneg %p101
        $region38: #{tpu_custom_call.1} parent=27 // pred_check_branch
          %315 = sbr.rel (%p313) target = $region40
        $region39: #{tpu_custom_call.1} parent=27 // pred_region
          %s317 = ssub.s32 512, 512
          %318 = vsyncadd %s309, %s317
          %s319 = smul.addr %s24, 4
          %s320 = sadd.s32 %s25, %s319
          %s321 = smul.addr %s320, 128
          %s322 = scalar_lea.hbm %s2, %s321
          %s323 = sshll.u32 %s312, 4
          %s324 = int_to_ptr.vmem [resolvable:$true] %s323
          %329 = dma.vmem_to_hbm [thread:$0]  %s324, 512, %s322, %s309, 128, 128, 8
        $region40: #{tpu_custom_call.1} parent=27 // pred_fallthru
          _
      $region28: #{tpu_custom_call.1} parent=5 // pred_fallthru
        _
      %p330 = scmp.le.s32.totalorder 2, %s15
      // Predicated region
      $region41: #{tpu_custom_call.1} parent=5 // pred_check
        %p331 = pneg %p330
      $region42: #{tpu_custom_call.1} parent=5 // pred_check_branch
        %333 = sbr.rel (%p331) target = $region44
      $region43: #{tpu_custom_call.1} parent=5 // pred_region
        %s334 = ssub.s32 %s15, 2
        // Predicated region
        $region45: #{tpu_custom_call.1} parent=43 // pred_check
          %p335 = pneg %p107
        $region46: #{tpu_custom_call.1} parent=43 // pred_check_branch
          %337 = sbr.rel (%p335) target = $region48
        $region47: #{tpu_custom_call.1} parent=43 // pred_region
          %s338 = sand.u32 %s92, 1
          %s339 = scalar_lea.sflag [#allocation4], %s338
          %s340 = sand.u32 %s92, 1
          %s341 = smul.addr %s340, 32
          %s342 = scalar_lea.vmem [#allocation7], %s341
          %343 = dma.done %s339, 512
        $region48: #{tpu_custom_call.1} parent=43 // pred_fallthru
          _
      $region44: #{tpu_custom_call.1} parent=5 // pred_fallthru
        _
    $region6: #{tpu_custom_call.1} parent=1 // loop_footer
      %s19 = sadd.s32 1, %s15
    $region7: #{tpu_custom_call.1} parent=1 // loop_footer_branch
      %14 = sbr.rel target = $region3
    $region8: #{tpu_custom_call.1} parent=1 // loop_exit
      _
    %344 = vsyncpa [#allocation3], 1
    %s345 = scalar_lea.sflag [#allocation3], 1
    %346 = vsyncpa %s345, 1
    %347 = vsyncpa [#allocation6], 1
    %s348 = scalar_lea.sflag [#allocation6], 1
    %349 = vsyncpa %s348, 1
    %350 = vsyncpa [#allocation4], 1
    %s351 = scalar_lea.sflag [#allocation4], 1
    %352 = vsyncpa %s351, 1

</llo_original>
